<compile_context>
chip_gen: v6e
topology: v6e:2x2x1
jax: 0.10.0
libtpu: 0.0.40
codegen_flags: <defaults>
</compile_context>

<pallas_src>
import jax
import jax.numpy as jnp
from jax.experimental import pallas as pl
from jax.experimental.pallas import tpu as pltpu


def _make_kernel(alpha_eff, n_true, tile_rows, num_classes):
    smooth_coeff = (1.0 - alpha_eff) / float(num_classes)
    inv_n = 1.0 / float(n_true)
    needs_row_mask = (n_true % tile_rows) != 0

    def kernel(logits_ref, tgt_ref, out_ref, acc_ref):
        # logits_ref: (TN, C) native dtype VMEM tile
        # tgt_ref:    (TN, 1) i32 VMEM tile
        # out_ref:    (1, 1)  f32 SMEM (scalar loss)
        # acc_ref:    (1, 1)  f32 SMEM scratch (running sum over grid steps)
        i = pl.program_id(0)

        @pl.when(i == 0)
        def _init():
            acc_ref[0, 0] = jnp.float32(0.0)

        x = logits_ref[...].astype(jnp.float32)                 # (TN, C) f32
        tn, c = x.shape

        # Numerically stable log-softmax pieces (all math in f32).
        m = jnp.max(x, axis=1, keepdims=True)                   # (TN, 1)
        z = x - m
        lse = jnp.log(jnp.sum(jnp.exp(z), axis=1, keepdims=True))   # (TN, 1)

        # sum_c(logp) = sum_c(z) - C * lse
        sum_logp = jnp.sum(z, axis=1, keepdims=True) - c * lse      # (TN, 1)

        # logp[target] = z[target] - lse (masked pick via iota compare).
        cls_idx = jax.lax.broadcasted_iota(jnp.int32, (tn, c), 1)
        z_at_tgt = jnp.sum(jnp.where(cls_idx == tgt_ref[...], z, 0.0),
                           axis=1, keepdims=True)                   # (TN, 1)
        logp_at_tgt = z_at_tgt - lse

        per_row = alpha_eff * logp_at_tgt + smooth_coeff * sum_logp  # (TN, 1)

        if needs_row_mask:
            row_idx = i * tile_rows + jax.lax.broadcasted_iota(
                jnp.int32, (tn, 1), 0)
            per_row = jnp.where(row_idx < n_true, per_row, 0.0)

        acc_ref[0, 0] += jnp.sum(per_row)

        @pl.when(i == pl.num_programs(0) - 1)
        def _finalize():
            out_ref[0, 0] = -acc_ref[0, 0] * inv_n

    return kernel


def _choose_tile_rows(n, c, itemsize, vmem_budget_bytes):
    # Keep the double-buffered logits block within the VMEM budget.
    bytes_per_row = max(1, 2 * c * itemsize)
    max_rows = max(1, vmem_budget_bytes // bytes_per_row)
    if max_rows >= n:
        return n
    return max(8, (int(max_rows) // 8) * 8)


def label_smoothing_loss(outputs, targets, alpha_init, *, tile_rows=None,
                         vmem_budget_bytes=8 * 1024 * 1024):
    """outputs: (N, C) float (native dtype); targets: (N,) int; alpha_init: float."""
    n, c = outputs.shape
    alpha_eff = 1.0 - float(alpha_init)        # LabelSmoothingLoss.__init__
    tgt = targets.reshape(n, 1).astype(jnp.int32)

    itemsize = jnp.dtype(outputs.dtype).itemsize
    if tile_rows is None:
        tile_rows = _choose_tile_rows(n, c, itemsize, vmem_budget_bytes)
    tile_rows = min(int(tile_rows), n)
    grid = (pl.cdiv(n, tile_rows),)

    kernel = _make_kernel(alpha_eff, n, tile_rows, c)

    out = pl.pallas_call(
        kernel,
        out_shape=jax.ShapeDtypeStruct((1, 1), jnp.float32),
        grid=grid,
        in_specs=[
            pl.BlockSpec((tile_rows, c), lambda i: (i, 0)),   # logits tiles (VMEM)
            pl.BlockSpec((tile_rows, 1), lambda i: (i, 0)),   # target tiles (VMEM)
        ],
        out_specs=pl.BlockSpec(memory_space=pltpu.MemorySpace.SMEM),
        scratch_shapes=[pltpu.SMEM((1, 1), jnp.float32)],
        compiler_params=pltpu.CompilerParams(
            dimension_semantics=("arbitrary",),
            vmem_limit_bytes=32 * 1024 * 1024,
        ),
    )(outputs, tgt)
    return out[0, 0]


def _reference(outputs, targets, alpha_init):
    n, c = outputs.shape
    alpha = jnp.full((n, 1), 1.0 - alpha_init, dtype=jnp.float32)
    one_hot = jax.nn.one_hot(targets, c, dtype=jnp.float32)
    smoothed = alpha * one_hot + (1.0 - alpha) / c
    logp = jax.nn.log_softmax(outputs.astype(jnp.float32), axis=1)
    return -jnp.mean(jnp.sum(logp * smoothed, axis=1))


if __name__ == "__main__":
    key = jax.random.PRNGKey(0)
    alpha_init = 0.1      # constructor argument of LabelSmoothingLoss

    cases = [
        # (N, C, dtype, tile_rows)
        (16, 128, jnp.float32, 8),      # multi-step grid, even tiling
        (12, 40, jnp.float32, 8),       # partial last tile -> row masking
        (8, 256, jnp.bfloat16, None),   # native bf16 logits kept bf16 in HBM
    ]
    for (n, c, dtype, tn) in cases:
        key, k1, k2 = jax.random.split(key, 3)
        outputs = jax.random.normal(k1, (n, c), dtype=jnp.float32).astype(dtype)
        targets = jax.random.randint(k2, (n,), 0, c, dtype=jnp.int32)
        indexs = jnp.arange(n)  # unused by the module's forward (signature parity)

        loss = label_smoothing_loss(outputs, targets, alpha_init, tile_rows=tn)
        loss = jax.block_until_ready(loss)

        ref = _reference(outputs, targets, alpha_init)
        assert jnp.allclose(loss, ref, atol=1e-5, rtol=1e-5), (n, c, dtype, loss, ref)

    print("KERNEL_OK")
</pallas_src>

<mosaic_0001>
module attributes {stable_mosaic.version = 11 : i64} {
  func.func @kernel(%arg0: i32, %arg1: memref<8x128xf32, #tpu.memory_space<vmem>>, %arg2: memref<8x1xi32, #tpu.memory_space<vmem>>, %arg3: memref<1x1xf32, #tpu.memory_space<smem>>, %arg4: memref<1x1xf32, #tpu.memory_space<smem>>) attributes {dimension_semantics = [#tpu.dimension_semantics<arbitrary>], iteration_bounds = array<i64: 2>, scalar_prefetch = 0 : i64, scratch_operands = 1 : i64, tpu.core_type = #tpu.core_type<tc>, window_params = [{transform_indices = @transform_0, window_bounds = array<i64: 8, 128>}, {transform_indices = @transform_1, window_bounds = array<i64: 8, 1>}, {transform_indices = @transform_2, window_bounds = array<i64: 1, 1>}]} {
    %c0_i32 = arith.constant 0 : i32
    %0 = arith.cmpi eq, %arg0, %c0_i32 : i32
    %1 = arith.extui %0 : i1 to i32
    %c0_i32_0 = arith.constant 0 : i32
    %2 = arith.cmpi ne, %1, %c0_i32_0 : i32
    scf.if %2 {
      %cst_17 = arith.constant 0.000000e+00 : f32
      %c0_18 = arith.constant 0 : index
      %c0_19 = arith.constant 0 : index
      %41 = memref.load %arg4[%c0_18, %c0_19] : memref<1x1xf32, #tpu.memory_space<smem>>
      memref.store %cst_17, %arg4[%c0_18, %c0_19] : memref<1x1xf32, #tpu.memory_space<smem>>
    } else {
    }
    %c0 = arith.constant 0 : index
    %c0_1 = arith.constant 0 : index
    %3 = vector.load %arg1[%c0, %c0_1] : memref<8x128xf32, #tpu.memory_space<vmem>>, vector<8x128xf32>
    %cst = arith.constant dense<0xFF800000> : vector<8xf32>
    %4 = vector.multi_reduction <maximumf>, %3, %cst [1] : vector<8x128xf32> to vector<8xf32>
    %5 = vector.shape_cast %4 : vector<8xf32> to vector<8x1xf32>
    %6 = vector.broadcast %5 : vector<8x1xf32> to vector<8x128xf32>
    %7 = arith.subf %3, %6 : vector<8x128xf32>
    %8 = math.exp %7 : vector<8x128xf32>
    %cst_2 = arith.constant dense<0.000000e+00> : vector<8xf32>
    %9 = vector.multi_reduction <add>, %8, %cst_2 [1] : vector<8x128xf32> to vector<8xf32>
    %10 = vector.shape_cast %9 : vector<8xf32> to vector<8x1xf32>
    %11 = math.log %10 : vector<8x1xf32>
    %cst_3 = arith.constant dense<0.000000e+00> : vector<8xf32>
    %12 = vector.multi_reduction <add>, %7, %cst_3 [1] : vector<8x128xf32> to vector<8xf32>
    %13 = vector.shape_cast %12 : vector<8xf32> to vector<8x1xf32>
    %cst_4 = arith.constant 1.280000e+02 : f32
    %14 = vector.broadcast %cst_4 : f32 to vector<8x1xf32>
    %15 = arith.mulf %14, %11 : vector<8x1xf32>
    %16 = arith.subf %13, %15 : vector<8x1xf32>
    %17 = tpu.iota {dimensions = array<i32: 1>} : vector<8x128xi32>
    %c0_5 = arith.constant 0 : index
    %c0_6 = arith.constant 0 : index
    %18 = vector.load %arg2[%c0_5, %c0_6] : memref<8x1xi32, #tpu.memory_space<vmem>>, vector<8x1xi32>
    %19 = vector.broadcast %18 : vector<8x1xi32> to vector<8x128xi32>
    %20 = arith.cmpi eq, %17, %19 : vector<8x128xi32>
    %cst_7 = arith.constant 0.000000e+00 : f32
    %21 = vector.broadcast %cst_7 : f32 to vector<8x128xf32>
    %22 = arith.select %20, %7, %21 : vector<8x128xi1>, vector<8x128xf32>
    %cst_8 = arith.constant dense<0.000000e+00> : vector<8xf32>
    %23 = vector.multi_reduction <add>, %22, %cst_8 [1] : vector<8x128xf32> to vector<8xf32>
    %24 = vector.shape_cast %23 : vector<8xf32> to vector<8x1xf32>
    %25 = arith.subf %24, %11 : vector<8x1xf32>
    %cst_9 = arith.constant 0.899999976 : f32
    %26 = vector.broadcast %cst_9 : f32 to vector<8x1xf32>
    %27 = arith.mulf %26, %25 : vector<8x1xf32>
    %cst_10 = arith.constant 7.812500e-04 : f32
    %28 = vector.broadcast %cst_10 : f32 to vector<8x1xf32>
    %29 = arith.mulf %28, %16 : vector<8x1xf32>
    %30 = arith.addf %27, %29 : vector<8x1xf32>
    %c0_11 = arith.constant 0 : index
    %c0_12 = arith.constant 0 : index
    %31 = memref.load %arg4[%c0_11, %c0_12] : memref<1x1xf32, #tpu.memory_space<smem>>
    %32 = vector.shape_cast %30 : vector<8x1xf32> to vector<1x8x1xf32>
    %cst_13 = arith.constant dense<0.000000e+00> : vector<1xf32>
    %33 = vector.multi_reduction <add>, %32, %cst_13 [1, 2] : vector<1x8x1xf32> to vector<1xf32>
    %34 = vector.shape_cast %33 : vector<1xf32> to vector<1x1x1xf32>
    %35 = vector.extract %34[0, 0, 0] : f32 from vector<1x1x1xf32>
    %36 = arith.addf %31, %35 : f32
    %c0_14 = arith.constant 0 : index
    %c0_15 = arith.constant 0 : index
    %37 = memref.load %arg4[%c0_14, %c0_15] : memref<1x1xf32, #tpu.memory_space<smem>>
    memref.store %36, %arg4[%c0_14, %c0_15] : memref<1x1xf32, #tpu.memory_space<smem>>
    %c1_i32 = arith.constant 1 : i32
    %38 = arith.cmpi eq, %arg0, %c1_i32 : i32
    %39 = arith.extui %38 : i1 to i32
    %c0_i32_16 = arith.constant 0 : i32
    %40 = arith.cmpi ne, %39, %c0_i32_16 : i32
    scf.if %40 {
      %c0_17 = arith.constant 0 : index
      %c0_18 = arith.constant 0 : index
      %41 = memref.load %arg4[%c0_17, %c0_18] : memref<1x1xf32, #tpu.memory_space<smem>>
      %cst_19 = arith.constant 0.000000e+00 : f32
      %42 = arith.subf %cst_19, %41 : f32
      %cst_20 = arith.constant 6.250000e-02 : f32
      %43 = arith.mulf %42, %cst_20 : f32
      %c0_21 = arith.constant 0 : index
      %c0_22 = arith.constant 0 : index
      %44 = memref.load %arg3[%c0_21, %c0_22] : memref<1x1xf32, #tpu.memory_space<smem>>
      memref.store %43, %arg3[%c0_21, %c0_22] : memref<1x1xf32, #tpu.memory_space<smem>>
    } else {
    }
    return
  }
  func.func @transform_0(%arg0: i32) -> (i32, i32) {
    %c0_i32 = arith.constant 0 : i32
    %c0_i32_0 = arith.constant 0 : i32
    return %arg0, %c0_i32 : i32, i32
  }
  func.func @transform_1(%arg0: i32) -> (i32, i32) {
    %c0_i32 = arith.constant 0 : i32
    %c0_i32_0 = arith.constant 0 : i32
    return %arg0, %c0_i32 : i32, i32
  }
  func.func @transform_2(%arg0: i32) -> (i32, i32) {
    %c0_i32 = arith.constant 0 : i32
    %c0_i32_0 = arith.constant 0 : i32
    %c0_i32_1 = arith.constant 0 : i32
    return %c0_i32, %c0_i32_0 : i32, i32
  }
}

</mosaic_0001>

<llo_original>
// kernel: tpu_custom_call.1
$region0: #{tpu_custom_call.1}
  #allocation0 [shape = 'u32[]', space=smem, size = 0x4, offset = 0x4, fixed_abs, tag = 'smem constant byte address 0x4 - core index']
  #allocation1 [shape = 'u32[144,128]{1,0:T(1,128)}', space=vmem, size = 0x12000, scoped, tag = 'internal scratch']
  #allocation2 [shape = 'f32[1,1]{1,0:T(1,128)}', space=smem, size = 0x200, scoped, tag = 'scratch operand']
  %s0 = inlined_call_operand.vmem [shape: f32[16,128], index: 0, kind: input, shape index: {}]
  %s1 = inlined_call_operand.vmem [shape: s32[16,1], index: 1, kind: input, shape index: {}]
  %s2 = inlined_call_operand.hbm [shape: f32[1,1], index: 2, kind: output, shape index: {}]
  %s3 = sld [smem:[#allocation0]]
  $region49: #{tpu_custom_call.1} parent=0
    _
  %s5 = ssub.s32 1, %s3
  %s6 = scalar_select 0, %s5, %s3
  $region1: #{tpu_custom_call.1} parent=0
    #allocation3 [shape = 'u8[512]{0}', space=smem, size = 0x200, scoped, tag = 'output window, operand 0, single buffered']
    #allocation4 [shape = 's32[2]{0}', space=sflag, size = 0x8, scoped, tag = 'scoped memory for tpu_custom_call.1']
    %7 = vsyncpa [#allocation4], 0
    loop: start=0, step=1, limit=4
    $region2: #{tpu_custom_call.1} parent=1 // loop_pre_header
      _
    $region3: #{tpu_custom_call.1} parent=1 // loop_header
      %s9 = sphi 0, %s13
      %p10 = scmp.ge.s32.totalorder %s9, 4
      %s19 = sphi 0, %s21
      %s22 = sphi 0, %s19
      %s23 = sphi 0, %s22
      %s39 = sphi 0, %s23
      %s45 = sphi 0, %s47
      %s48 = sphi 0, %s45
      %s49 = sphi 0, %s48
      %s65 = sphi 0, %s49
      %s69 = sphi 0, %s69
      %s71 = sphi 0, %s69
      %s72 = sphi 0, %s71
      %s86 = sphi 0, %s72
    $region4: #{tpu_custom_call.1} parent=1 // loop_header_branch
      %12 = sbr.rel (%p10) target = $region8
    $region5: #{tpu_custom_call.1} parent=1 // loop_body
      %s14 = ssub.s32 %s9, 1
      %s15 = ssub.s32 %s9, 2
      %s16 = sadd.s32 %s9, 1
      %s17 = ssub.s32 %s9, %s16
      %p18 = scmp.eq.s32.totalorder %s17, 0
      %s20 = sadd.s32 %s19, 1
      %s21 = scalar_select %p18, %s19, %s20
      %p24 = pneg %p18
      %p25 = scmp.eq.s32.totalorder %s9, 1
      %p26 = por %p24, %p25
      %p27 = scmp.ne.s32.totalorder %s19, %s22
      %p28 = scmp.eq.s32.totalorder %s9, 0
      %p29 = por %p27, %p28
      %p30 = scmp.ne.s32.totalorder %s19, %s22
      %p31 = scmp.eq.s32.totalorder %s14, 1
      %p32 = por %p30, %p31
      %p33 = scmp.ne.s32.totalorder %s22, %s23
      %p34 = scmp.eq.s32.totalorder %s14, 0
      %p35 = por %p33, %p34
      %p36 = scmp.ne.s32.totalorder %s22, %s23
      %p37 = scmp.eq.s32.totalorder %s15, 1
      %p38 = por %p36, %p37
      %p40 = scmp.ne.s32.totalorder %s23, %s39
      %p41 = scmp.eq.s32.totalorder %s15, 0
      %p42 = por %p40, %p41
      %s43 = ssub.s32 %s9, %s16
      %p44 = scmp.eq.s32.totalorder %s43, 0
      %s46 = sadd.s32 %s45, 1
      %s47 = scalar_select %p44, %s45, %s46
      %p50 = pneg %p44
      %p51 = scmp.eq.s32.totalorder %s9, 1
      %p52 = por %p50, %p51
      %p53 = scmp.ne.s32.totalorder %s45, %s48
      %p54 = scmp.eq.s32.totalorder %s9, 0
      %p55 = por %p53, %p54
      %p56 = scmp.ne.s32.totalorder %s45, %s48
      %p57 = scmp.eq.s32.totalorder %s14, 1
      %p58 = por %p56, %p57
      %p59 = scmp.ne.s32.totalorder %s48, %s49
      %p60 = scmp.eq.s32.totalorder %s14, 0
      %p61 = por %p59, %p60
      %p62 = scmp.ne.s32.totalorder %s48, %s49
      %p63 = scmp.eq.s32.totalorder %s15, 1
      %p64 = por %p62, %p63
      %p66 = scmp.ne.s32.totalorder %s49, %s65
      %p67 = scmp.eq.s32.totalorder %s15, 0
      %p68 = por %p66, %p67
      %s70 = sadd.s32 %s69, 1
      %p73 = scmp.eq.s32.totalorder %s9, 1
      %p74 = scmp.ne.s32.totalorder %s69, %s71
      %p75 = scmp.eq.s32.totalorder %s9, 0
      %p76 = por %p74, %p75
      %p77 = scmp.ne.s32.totalorder %s69, %s71
      %p78 = scmp.eq.s32.totalorder %s14, 1
      %p79 = por %p77, %p78
      %p80 = scmp.ne.s32.totalorder %s71, %s72
      %p81 = scmp.eq.s32.totalorder %s14, 0
      %p82 = por %p80, %p81
      %p83 = scmp.ne.s32.totalorder %s71, %s72
      %p84 = scmp.eq.s32.totalorder %s15, 1
      %p85 = por %p83, %p84
      %p87 = scmp.ne.s32.totalorder %s72, %s86
      %p88 = scmp.eq.s32.totalorder %s15, 0
      %p89 = por %p87, %p88
      %p90 = scmp.le.s32.totalorder 1, %s9
      %p91 = scmp.lt.s32.totalorder %s9, 3
      %p92 = pnand %p90, %p91
      %p93 = pneg %p92
      // Predicated region
      $region9: #{tpu_custom_call.1} parent=5 // pred_check
        _
      $region10: #{tpu_custom_call.1} parent=5 // pred_check_branch
        %95 = sbr.rel (%p92) target = $region12
      $region11: #{tpu_custom_call.1} parent=5 // pred_region
        %s96 = ssub.s32 %s9, 1
      $region12: #{tpu_custom_call.1} parent=5 // pred_fallthru
        _
      %p97 = scmp.lt.s32.totalorder %s9, 2
      // Predicated region
      $region13: #{tpu_custom_call.1} parent=5 // pred_check
        %p98 = pneg %p97
      $region14: #{tpu_custom_call.1} parent=5 // pred_check_branch
        %100 = sbr.rel (%p98) target = $region16
      $region15: #{tpu_custom_call.1} parent=5 // pred_region
        // Predicated region
        $region17: #{tpu_custom_call.1} parent=15 // pred_check
          %p101 = pneg %p29
        $region18: #{tpu_custom_call.1} parent=15 // pred_check_branch
          %103 = sbr.rel (%p101) target = $region20
        $region19: #{tpu_custom_call.1} parent=15 // pred_region
          %p104 = scmp.lt.s32.totalorder %s9, 1
          %s105 = scalar_select %p104, %s9, 1
          %s106 = smul.addr %s105, 8
          %s107 = scalar_lea.vmem %s0, %s106
        $region20: #{tpu_custom_call.1} parent=15 // pred_fallthru
          _
        // Predicated region
        $region21: #{tpu_custom_call.1} parent=15 // pred_check
          %p108 = pneg %p55
        $region22: #{tpu_custom_call.1} parent=15 // pred_check_branch
          %110 = sbr.rel (%p108) target = $region24
        $region23: #{tpu_custom_call.1} parent=15 // pred_region
          %p111 = scmp.lt.s32.totalorder %s9, 1
          %s112 = scalar_select %p111, %s9, 1
          %s113 = smul.addr %s112, 8
          %s114 = scalar_lea.vmem %s1, %s113
        $region24: #{tpu_custom_call.1} parent=15 // pred_fallthru
          _
      $region16: #{tpu_custom_call.1} parent=5 // pred_fallthru
        _
      %p115 = scmp.le.s32.totalorder 1, %s9
      %p116 = scmp.lt.s32.totalorder %s9, 3
      %p117 = pnand %p115, %p116
      %p118 = pneg %p117
      // Predicated region
      $region25: #{tpu_custom_call.1} parent=5 // pred_check
        _
      $region26: #{tpu_custom_call.1} parent=5 // pred_check_branch
        %120 = sbr.rel (%p117) target = $region28
      $region27: #{tpu_custom_call.1} parent=5 // pred_region
        %s121 = ssub.s32 %s9, 1
        %p122 = scmp.lt.s32.totalorder %s14, 1
        %s123 = scalar_select %p122, %s14, 1
        %s124 = smul.addr %s123, 8
        %s125 = scalar_lea.vmem %s0, %s124
        %p126 = pneg %p35
        %p127 = pneg %p32
        %p128 = scmp.lt.s32.totalorder %s14, 1
        %s129 = scalar_select %p128, %s14, 1
        %s130 = smul.addr %s129, 8
        %s131 = scalar_lea.vmem %s1, %s130
        %p132 = pneg %p61
        %p133 = pneg %p58
        %p134 = pneg %p82
        %p135 = pneg %p79
        %p136 = scmp.lt.s32.totalorder %s14, 1
        %s137 = scalar_select %p136, %s14, 1
        %s138 = smul.addr %s137, 8
        %s139 = scalar_lea.vmem %s0, %s138
        %p140 = scmp.lt.s32.totalorder %s14, 1
        %s141 = scalar_select %p140, %s14, 1
        %s142 = smul.addr %s141, 8
        %s143 = scalar_lea.vmem %s1, %s142
        %p144 = scmp.eq.s32.totalorder %s14, 0
        // Predicated region
        $region29: #{tpu_custom_call.1} parent=27 // pred_check
          %p145 = pneg %p144
        $region30: #{tpu_custom_call.1} parent=27 // pred_check_branch
          %147 = sbr.rel (%p145) target = $region32
        $region31: #{tpu_custom_call.1} parent=27 // pred_region
          %s148 = scalar_lea.smem [#allocation2], 0
          %149 = sst [smem:[%s148]] 0.0
        $region32: #{tpu_custom_call.1} parent=27 // pred_fallthru
          _
        %v150 = vld [vmem:[%s139] sm:$0xff]
        %151 = vmax.xlane.f32.xlu0 %v150
        %v152 = vpop.xlane.xlu0 %151
        %v153 = vsub.f32 %v150, %v152
        %v154 = vmul.f32 %v153, 1.442695
        %v155 = vpow.pop %v154
        %156 = vadd.xlane.f32.xlu0 %v155
        %v157 = vpop.xlane.xlu0 %156
        %v158 = vlog2.pop %v157
        %v159 = vmul.f32 %v158, 0.6931472
        %160 = vadd.xlane.f32.xlu0 %v153
        %v161 = vpop.xlane.xlu0 %160
        %v162 = vmul.f32 %v159, 128.0
        %v163 = vsub.f32 %v161, %v162
        %v164 = vlaneseq
        %v165 = vand.u32 %v164, 127
        %v166 = vld [vmem:[%s143] sm:$0xff]
        %167 = vset.pattern.permute.xlu0 0
        %168 = vperm.xlu0 %167, %v166
        %v169 = vpop.permute.xlu0 %168
        %vm170 = vcmp.eq.s32.totalorder %v165, %v169
        %v171 = vsel %vm170, %v153, 0.0
        %172 = vadd.xlane.f32.xlu0 %v171
        %v173 = vpop.xlane.xlu0 %172
        %v174 = vsub.f32 %v173, %v159
        %v175 = vmul.f32 %v174, 0.9
        %v176 = vmul.f32 %v163, 0.00078125
        %v177 = vadd.f32 %v175, %v176
        %s178 = sld [smem:[#allocation2]]
        %vm179 = vcmask 7168
        %v180 = vsel %vm179, %v177, 0.0
        %181 = vadd.xlane.f32.xlu0 %v180
        %v182 = vpop.xlane.xlu0 %181
        %v183 = vrot.slane %v182, 4
        %v184 = vadd.f32 %v182, %v183
        %v185 = vrot.slane %v184, 2
        %v186 = vadd.f32 %v184, %v185
        %v187 = vrot.slane %v186, 1
        %v188 = vadd.f32 %v186, %v187
        %s189 = vtos %v188
        %s190 = sadd.f32 %s178, %s189
        %s191 = scalar_lea.smem [#allocation2], 0
        %192 = sst [smem:[%s191]] %s190
        %p193 = scmp.eq.s32.totalorder %s14, 1
        // Predicated region
        $region33: #{tpu_custom_call.1} parent=27 // pred_check
          %p194 = pneg %p193
        $region34: #{tpu_custom_call.1} parent=27 // pred_check_branch
          %196 = sbr.rel (%p194) target = $region36
        $region35: #{tpu_custom_call.1} parent=27 // pred_region
          %s197 = sld [smem:[#allocation2]]
          %s198 = ssub.f32 0.0, %s197
          %s199 = smul.f32 %s198, 0.0625
          %s200 = scalar_lea.smem [#allocation3], 0
          %201 = sst [smem:[%s200]] %s199
        $region36: #{tpu_custom_call.1} parent=27 // pred_fallthru
          _
        // Predicated region
        $region37: #{tpu_custom_call.1} parent=27 // pred_check
          %p202 = pneg %p79
        $region38: #{tpu_custom_call.1} parent=27 // pred_check_branch
          %204 = sbr.rel (%p202) target = $region40
        $region39: #{tpu_custom_call.1} parent=27 // pred_region
          %s206 = ssub.s32 16, 16
          %207 = vsyncadd [#allocation4], %s206
          %210 = dma.smem_to_hbm [#allocation3], 16, %s2, [#allocation4]
        $region40: #{tpu_custom_call.1} parent=27 // pred_fallthru
          _
        // Predicated region
        $region41: #{tpu_custom_call.1} parent=27 // pred_check
          %p211 = pneg %p79
        $region42: #{tpu_custom_call.1} parent=27 // pred_check_branch
          %213 = sbr.rel (%p211) target = $region44
        $region43: #{tpu_custom_call.1} parent=27 // pred_region
          %214 = dma.done [#allocation4], 16
        $region44: #{tpu_custom_call.1} parent=27 // pred_fallthru
          _
        %215 = sfence
      $region28: #{tpu_custom_call.1} parent=5 // pred_fallthru
        _
      %p216 = scmp.le.s32.totalorder 2, %s9
      // Predicated region
      $region45: #{tpu_custom_call.1} parent=5 // pred_check
        %p217 = pneg %p216
      $region46: #{tpu_custom_call.1} parent=5 // pred_check_branch
        %219 = sbr.rel (%p217) target = $region48
      $region47: #{tpu_custom_call.1} parent=5 // pred_region
        %s220 = ssub.s32 %s9, 2
      $region48: #{tpu_custom_call.1} parent=5 // pred_fallthru
        _
    $region6: #{tpu_custom_call.1} parent=1 // loop_footer
      %s13 = sadd.s32 1, %s9
    $region7: #{tpu_custom_call.1} parent=1 // loop_footer_branch
      %8 = sbr.rel target = $region3
    $region8: #{tpu_custom_call.1} parent=1 // loop_exit
      _
    %221 = vsyncpa [#allocation4], 1
    %s222 = scalar_lea.sflag [#allocation4], 1
    %223 = vsyncpa %s222, 1

</llo_original>
